<compile_context>
chip_gen: v7x
topology: tpu7x:2x2x1
jax: 0.10.0
libtpu: 0.0.40
codegen_flags: <defaults>
</compile_context>

<pallas_src>
import functools

import jax
import jax.numpy as jnp
from jax import lax
from jax.experimental import pallas as pl
from jax.experimental.pallas import tpu as pltpu

EPS = 1e-5
F_IN = 38
F_HID = 20


def _round_up(a, b):
    return (a + b - 1) // b * b


# ---------------- pass 1: batch statistics (sum x, X^T X) on the MXU ----------------
def _stats_kernel(x_ref, sum_ref, gram_ref):
    # grid = (core_split, tiles_per_core); accumulate along axis 1 per core.
    @pl.when(pl.program_id(1) == 0)
    def _():
        sum_ref[...] = jnp.zeros_like(sum_ref)
        gram_ref[...] = jnp.zeros_like(gram_ref)

    x = x_ref[...].astype(jnp.float32)                       # (T, 38)
    ones = jnp.ones((1, x.shape[0]), jnp.float32)
    # Batch reductions on the MXU (idle otherwise) instead of XLU sublane reduces.
    sum_ref[...] += jnp.dot(ones, x, preferred_element_type=jnp.float32)[None]   # (1,1,38)
    gram_ref[...] += lax.dot_general(                                             # (1,38,38)
        x, x, dimension_numbers=(((0,), (0,)), ((), ())),
        preferred_element_type=jnp.float32)[None]


# ---------------- pass 2: fused (BN1+Linear1+BN2) affine + ReLU + Linear2 ----------------
def _apply_kernel(x_ref, w1_ref, misc_ref, o_ref):
    # misc rows: 0 = folded bias b1'', 1 = w2 row, 2 = b2 (broadcast).
    x = x_ref[...].astype(jnp.float32)                       # (T, 38)
    h = jnp.dot(x, w1_ref[...], preferred_element_type=jnp.float32)  # (T, 20) MXU
    h = jnp.maximum(h + misc_ref[0:1, :], 0.0)               # + b1'' , ReLU
    # Final Linear(20 -> 1) as w2_row @ h^T: produces a lane-dense (1, T) block
    # (batch on the lane axis) instead of a masked 1-wide store.
    out = lax.dot_general(
        misc_ref[1:2, :], h,
        dimension_numbers=(((1,), (1,)), ((), ())),
        preferred_element_type=jnp.float32)                  # (1, T)
    o_ref[...] = (out + misc_ref[2:3, 0:1]).astype(o_ref.dtype)


def zhengqi_forward(x, params, block_rows=16384):
    """x: (N, 38) float32 (or bf16).  Returns (N, 1) float32."""
    N, F = x.shape
    assert F == F_IN, F

    # Batch tile: multiple of 128 (lane-dense output blocks), capped for VMEM.
    T = min(_round_up(block_rows, 128), _round_up(N, 128))
    num_tiles = pl.cdiv(N, T)
    core_split = 2 if num_tiles >= 2 else 1                  # v7x megacore split of pass 1
    tiles_per_core = pl.cdiv(num_tiles, core_split)
    total_tiles = core_split * tiles_per_core
    Np = total_tiles * T
    if Np != N:
        # Zero rows are harmless for sum / X^T X; padded outputs are sliced off.
        x = jnp.pad(x, ((0, Np - N), (0, 0)))

    # ---- pass 1: global batch statistics (per-core accumulators, summed below) ----
    xsum_pc, xgram_pc = pl.pallas_call(
        _stats_kernel,
        out_shape=(jax.ShapeDtypeStruct((core_split, 1, F_IN), jnp.float32),
                   jax.ShapeDtypeStruct((core_split, F_IN, F_IN), jnp.float32)),
        grid_spec=pltpu.PrefetchScalarGridSpec(
            num_scalar_prefetch=0,
            grid=(core_split, tiles_per_core),
            in_specs=[pl.BlockSpec(
                (T, F_IN), lambda c, i: (c * tiles_per_core + i, 0))],
            out_specs=(pl.BlockSpec((1, 1, F_IN), lambda c, i: (c, 0, 0)),
                       pl.BlockSpec((1, F_IN, F_IN), lambda c, i: (c, 0, 0)))),
        compiler_params=pltpu.CompilerParams(
            dimension_semantics=("parallel", "arbitrary")),
    )(x)
    xsum = jnp.sum(xsum_pc, axis=0)                          # (1, 38)
    xgram = jnp.sum(xgram_pc, axis=0)                        # (38, 38)

    # ---- tiny XLA glue: fold BN1 + BN2 (training-mode batch stats) into Linear1 ----
    g1, be1 = params["bn1_gamma"], params["bn1_beta"]
    w1, b1 = params["w1"], params["b1"]
    g2, be2 = params["bn2_gamma"], params["bn2_beta"]
    w2, b2 = params["w2"], params["b2"]

    n = jnp.float32(N)
    mu1 = xsum / n                                           # (1, 38)
    ex2 = xgram / n                                          # (38, 38) second moments
    var1 = jnp.diagonal(ex2)[None, :] - mu1 * mu1            # (1, 38) biased var
    s1 = g1 * lax.rsqrt(var1 + EPS)                          # (1, 38)
    w1p = w1 * s1.T                                          # (38, 20)
    b1p = (be1 - mu1 * s1) @ w1 + b1                         # (1, 20)

    # BN2 batch stats of h = x @ w1p + b1p, derived exactly from x statistics.
    cov = ex2 - mu1.T @ mu1                                  # (38, 38)
    mu_h = mu1 @ w1p + b1p                                   # (1, 20)
    var_h = jnp.sum(w1p * (cov @ w1p), axis=0, keepdims=True)  # (1, 20) = diag(w1p^T Cov w1p)
    s2 = g2 * lax.rsqrt(var_h + EPS)                         # (1, 20)
    w1pp = w1p * s2                                          # (38, 20)
    b1pp = (b1p - mu_h) * s2 + be2                           # (1, 20)

    misc = jnp.concatenate(
        [b1pp,
         w2.reshape(1, F_HID),
         jnp.broadcast_to(b2.reshape(1, 1), (1, F_HID))], axis=0)  # (3, 20)

    # ---- pass 2: apply, lane-dense (1, Np) output, megacore-parallel ----
    out_t = pl.pallas_call(
        _apply_kernel,
        out_shape=jax.ShapeDtypeStruct((1, Np), jnp.float32),
        grid_spec=pltpu.PrefetchScalarGridSpec(
            num_scalar_prefetch=0,
            grid=(total_tiles,),
            in_specs=[pl.BlockSpec((T, F_IN), lambda i: (i, 0)),
                      pl.BlockSpec((F_IN, F_HID), lambda i: (0, 0)),
                      pl.BlockSpec((3, F_HID), lambda i: (0, 0))],
            out_specs=pl.BlockSpec((1, T), lambda i: (0, i))),
        compiler_params=pltpu.CompilerParams(
            dimension_semantics=("parallel",)),
    )(x, w1pp, misc)

    return out_t[0, :N, None]                                # (N, 1)


def init_params(key):
    """Kernel-layout parameters (PyTorch Linear weights kept transposed: (in, out))."""
    k1, k2, k3, k4, k5, k6 = jax.random.split(key, 6)
    return {
        "bn1_gamma": 1.0 + 0.1 * jax.random.normal(k1, (1, 38), jnp.float32),
        "bn1_beta":  0.1 * jax.random.normal(k2, (1, 38), jnp.float32),
        "w1": 0.2 * jax.random.normal(k3, (38, 20), jnp.float32),
        "b1": 0.05 * jax.random.normal(k4, (1, 20), jnp.float32),
        "bn2_gamma": 1.0 + 0.1 * jax.random.normal(k5, (1, 20), jnp.float32),
        "bn2_beta":  0.1 * jax.random.normal(k6, (1, 20), jnp.float32),
        "w2": 0.3 * jax.random.normal(jax.random.fold_in(key, 7), (20, 1), jnp.float32),
        "b2": 0.05 * jax.random.normal(jax.random.fold_in(key, 8), (1, 1), jnp.float32),
    }


def reference_forward(x, p):
    """Pure-JAX reference with the module's exact (training-mode BN) semantics."""
    mu1 = jnp.mean(x, axis=0, keepdims=True)
    var1 = jnp.mean((x - mu1) ** 2, axis=0, keepdims=True)
    h = (x - mu1) / jnp.sqrt(var1 + EPS) * p["bn1_gamma"] + p["bn1_beta"]
    h = h @ p["w1"] + p["b1"]
    mu2 = jnp.mean(h, axis=0, keepdims=True)
    var2 = jnp.mean((h - mu2) ** 2, axis=0, keepdims=True)
    h = (h - mu2) / jnp.sqrt(var2 + EPS) * p["bn2_gamma"] + p["bn2_beta"]
    h = jnp.maximum(h, 0.0)
    return h @ p["w2"] + p["b2"]


if __name__ == "__main__":
    N = 300  # small, ragged batch (exercises tiling + padding; BN needs N > 1)
    key = jax.random.PRNGKey(0)
    x = jax.random.normal(key, (N, 38), jnp.float32)

    params = init_params(jax.random.PRNGKey(42))

    # block_rows=128 -> 3 real tiles of 128 rows, padded to 4 (2 per "core" slot),
    # exercising the multi-tile / split-accumulator / padding paths.
    fwd = jax.jit(functools.partial(zhengqi_forward, block_rows=128))
    out = jax.block_until_ready(fwd(x, params))

    ref = reference_forward(x, params)
    assert out.shape == (N, 1), out.shape
    err = float(jnp.max(jnp.abs(out - ref)))
    assert err < 2e-4, err

    print("KERNEL_OK")
</pallas_src>

<mosaic_0001>
module attributes {stable_mosaic.version = 11 : i64} {
  func.func @_stats_kernel(%arg0: i32, %arg1: i32, %arg2: memref<128x38xf32, #tpu.memory_space<vmem>>, %arg3: memref<1x1x38xf32, #tpu.memory_space<vmem>>, %arg4: memref<1x38x38xf32, #tpu.memory_space<vmem>>) attributes {dimension_semantics = [#tpu.dimension_semantics<parallel>, #tpu.dimension_semantics<arbitrary>], iteration_bounds = array<i64: 2, 2>, scalar_prefetch = 0 : i64, scratch_operands = 0 : i64, tpu.core_type = #tpu.core_type<tc>, window_params = [{transform_indices = @transform_0, window_bounds = array<i64: 128, 38>}, {transform_indices = @transform_1, window_bounds = array<i64: 1, 1, 38>}, {transform_indices = @transform_2, window_bounds = array<i64: 1, 38, 38>}]} {
    %c0_i32 = arith.constant 0 : i32
    %0 = arith.cmpi eq, %arg1, %c0_i32 : i32
    %1 = arith.extui %0 : i1 to i32
    %c0_i32_0 = arith.constant 0 : i32
    %2 = arith.cmpi ne, %1, %c0_i32_0 : i32
    scf.if %2 {
      %cst_16 = arith.constant 0.000000e+00 : f32
      %15 = vector.broadcast %cst_16 : f32 to vector<1x1x38xf32>
      %c0_17 = arith.constant 0 : index
      %c0_18 = arith.constant 0 : index
      %c0_19 = arith.constant 0 : index
      %16 = vector.load %arg3[%c0_17, %c0_18, %c0_19] : memref<1x1x38xf32, #tpu.memory_space<vmem>>, vector<1x1x38xf32>
      tpu.vector_store %arg3[%c0_17, %c0_18, %c0_19], %15 {strides = array<i32>} : memref<1x1x38xf32, #tpu.memory_space<vmem>>, vector<1x1x38xf32>,
      %cst_20 = arith.constant 0.000000e+00 : f32
      %17 = vector.broadcast %cst_20 : f32 to vector<1x38x38xf32>
      %c0_21 = arith.constant 0 : index
      %c0_22 = arith.constant 0 : index
      %c0_23 = arith.constant 0 : index
      %18 = vector.load %arg4[%c0_21, %c0_22, %c0_23] : memref<1x38x38xf32, #tpu.memory_space<vmem>>, vector<1x38x38xf32>
      tpu.vector_store %arg4[%c0_21, %c0_22, %c0_23], %17 {strides = array<i32>} : memref<1x38x38xf32, #tpu.memory_space<vmem>>, vector<1x38x38xf32>,
    } else {
    }
    %c0 = arith.constant 0 : index
    %c0_1 = arith.constant 0 : index
    %3 = vector.load %arg2[%c0, %c0_1] : memref<128x38xf32, #tpu.memory_space<vmem>>, vector<128x38xf32>
    %cst = arith.constant 1.000000e+00 : f32
    %4 = vector.broadcast %cst : f32 to vector<1x128xf32>
    %c0_2 = arith.constant 0 : index
    %c0_3 = arith.constant 0 : index
    %c0_4 = arith.constant 0 : index
    %5 = vector.load %arg3[%c0_2, %c0_3, %c0_4] : memref<1x1x38xf32, #tpu.memory_space<vmem>>, vector<1x1x38xf32>
    %cst_5 = arith.constant dense<0.000000e+00> : vector<1x38xf32>
    %6 = tpu.matmul %4, %3, %cst_5 {dimension_numbers = #tpu.dot_dimension_numbers<[1], [0], [0], [1], [0, 0, 1, 1], [], []>} : vector<1x128xf32>, vector<128x38xf32>, vector<1x38xf32> -> vector<1x38xf32>
    %7 = vector.shape_cast %6 : vector<1x38xf32> to vector<1x1x38xf32>
    %8 = arith.addf %5, %7 : vector<1x1x38xf32>
    %c0_6 = arith.constant 0 : index
    %c0_7 = arith.constant 0 : index
    %c0_8 = arith.constant 0 : index
    %9 = vector.load %arg3[%c0_6, %c0_7, %c0_8] : memref<1x1x38xf32, #tpu.memory_space<vmem>>, vector<1x1x38xf32>
    tpu.vector_store %arg3[%c0_6, %c0_7, %c0_8], %8 {strides = array<i32>} : memref<1x1x38xf32, #tpu.memory_space<vmem>>, vector<1x1x38xf32>,
    %c0_9 = arith.constant 0 : index
    %c0_10 = arith.constant 0 : index
    %c0_11 = arith.constant 0 : index
    %10 = vector.load %arg4[%c0_9, %c0_10, %c0_11] : memref<1x38x38xf32, #tpu.memory_space<vmem>>, vector<1x38x38xf32>
    %cst_12 = arith.constant dense<0.000000e+00> : vector<38x38xf32>
    %11 = tpu.matmul %3, %3, %cst_12 {dimension_numbers = #tpu.dot_dimension_numbers<[0], [0], [1], [1], [0, 1, 1, 1], [], []>} : vector<128x38xf32>, vector<128x38xf32>, vector<38x38xf32> -> vector<38x38xf32>
    %12 = vector.shape_cast %11 : vector<38x38xf32> to vector<1x38x38xf32>
    %13 = arith.addf %10, %12 : vector<1x38x38xf32>
    %c0_13 = arith.constant 0 : index
    %c0_14 = arith.constant 0 : index
    %c0_15 = arith.constant 0 : index
    %14 = vector.load %arg4[%c0_13, %c0_14, %c0_15] : memref<1x38x38xf32, #tpu.memory_space<vmem>>, vector<1x38x38xf32>
    tpu.vector_store %arg4[%c0_13, %c0_14, %c0_15], %13 {strides = array<i32>} : memref<1x38x38xf32, #tpu.memory_space<vmem>>, vector<1x38x38xf32>,
    return
  }
  func.func @transform_0(%arg0: i32, %arg1: i32) -> (i32, i32) {
    %c2_i32 = arith.constant 2 : i32
    %0 = arith.muli %arg0, %c2_i32 : i32
    %1 = arith.addi %0, %arg1 : i32
    %c0_i32 = arith.constant 0 : i32
    %c0_i32_0 = arith.constant 0 : i32
    return %1, %c0_i32 : i32, i32
  }
  func.func @transform_1(%arg0: i32, %arg1: i32) -> (i32, i32, i32) {
    %c0_i32 = arith.constant 0 : i32
    %c0_i32_0 = arith.constant 0 : i32
    %c0_i32_1 = arith.constant 0 : i32
    return %arg0, %c0_i32, %c0_i32_0 : i32, i32, i32
  }
  func.func @transform_2(%arg0: i32, %arg1: i32) -> (i32, i32, i32) {
    %c0_i32 = arith.constant 0 : i32
    %c0_i32_0 = arith.constant 0 : i32
    %c0_i32_1 = arith.constant 0 : i32
    return %arg0, %c0_i32, %c0_i32_0 : i32, i32, i32
  }
}

module attributes {stable_mosaic.version = 11 : i64} {
  func.func @_apply_kernel(%arg0: i32, %arg1: memref<128x38xf32, #tpu.memory_space<vmem>>, %arg2: memref<38x20xf32, #tpu.memory_space<vmem>>, %arg3: memref<3x20xf32, #tpu.memory_space<vmem>>, %arg4: memref<1x128xf32, #tpu.memory_space<vmem>>) attributes {dimension_semantics = [#tpu.dimension_semantics<parallel>], iteration_bounds = array<i64: 4>, scalar_prefetch = 0 : i64, scratch_operands = 0 : i64, tpu.core_type = #tpu.core_type<tc>, window_params = [{transform_indices = @transform_0, window_bounds = array<i64: 128, 38>}, {pipeline_mode = #tpu.pipeline_mode<synchronous>, transform_indices = @transform_1, window_bounds = array<i64: 38, 20>}, {pipeline_mode = #tpu.pipeline_mode<synchronous>, transform_indices = @transform_2, window_bounds = array<i64: 3, 20>}, {transform_indices = @transform_3, window_bounds = array<i64: 1, 128>}]} {
    %c0 = arith.constant 0 : index
    %c0_0 = arith.constant 0 : index
    %0 = vector.load %arg1[%c0, %c0_0] : memref<128x38xf32, #tpu.memory_space<vmem>>, vector<128x38xf32>
    %c0_1 = arith.constant 0 : index
    %c0_2 = arith.constant 0 : index
    %1 = vector.load %arg2[%c0_1, %c0_2] : memref<38x20xf32, #tpu.memory_space<vmem>>, vector<38x20xf32>
    %cst = arith.constant dense<0.000000e+00> : vector<128x20xf32>
    %2 = tpu.matmul %0, %1, %cst {dimension_numbers = #tpu.dot_dimension_numbers<[1], [0], [0], [1], [0, 0, 1, 1], [], []>} : vector<128x38xf32>, vector<38x20xf32>, vector<128x20xf32> -> vector<128x20xf32>
    %c0_3 = arith.constant 0 : index
    %c0_4 = arith.constant 0 : index
    %3 = vector.load %arg3[%c0_3, %c0_4] : memref<3x20xf32, #tpu.memory_space<vmem>>, vector<1x20xf32>
    %4 = vector.broadcast %3 : vector<1x20xf32> to vector<128x20xf32>
    %5 = arith.addf %2, %4 : vector<128x20xf32>
    %cst_5 = arith.constant 0.000000e+00 : f32
    %6 = vector.broadcast %cst_5 : f32 to vector<128x20xf32>
    %7 = arith.maximumf %5, %6 : vector<128x20xf32>
    %c1 = arith.constant 1 : index
    %c0_6 = arith.constant 0 : index
    %8 = vector.load %arg3[%c1, %c0_6] : memref<3x20xf32, #tpu.memory_space<vmem>>, vector<1x20xf32>
    %cst_7 = arith.constant dense<0.000000e+00> : vector<1x128xf32>
    %9 = tpu.matmul %8, %7, %cst_7 {dimension_numbers = #tpu.dot_dimension_numbers<[1], [1], [0], [0], [0, 0, 1, 0], [], []>} : vector<1x20xf32>, vector<128x20xf32>, vector<1x128xf32> -> vector<1x128xf32>
    %c2 = arith.constant 2 : index
    %c0_8 = arith.constant 0 : index
    %10 = vector.load %arg3[%c2, %c0_8] : memref<3x20xf32, #tpu.memory_space<vmem>>, vector<1x1xf32>
    %11 = vector.broadcast %10 : vector<1x1xf32> to vector<1x128xf32>
    %12 = arith.addf %9, %11 : vector<1x128xf32>
    %c0_9 = arith.constant 0 : index
    %c0_10 = arith.constant 0 : index
    %13 = vector.load %arg4[%c0_9, %c0_10] : memref<1x128xf32, #tpu.memory_space<vmem>>, vector<1x128xf32>
    tpu.vector_store %arg4[%c0_9, %c0_10], %12 {strides = array<i32>} : memref<1x128xf32, #tpu.memory_space<vmem>>, vector<1x128xf32>,
    return
  }
  func.func @transform_0(%arg0: i32) -> (i32, i32) {
    %c0_i32 = arith.constant 0 : i32
    %c0_i32_0 = arith.constant 0 : i32
    return %arg0, %c0_i32 : i32, i32
  }
  func.func @transform_1(%arg0: i32) -> (i32, i32) {
    %c0_i32 = arith.constant 0 : i32
    %c0_i32_0 = arith.constant 0 : i32
    %c0_i32_1 = arith.constant 0 : i32
    return %c0_i32, %c0_i32_0 : i32, i32
  }
  func.func @transform_2(%arg0: i32) -> (i32, i32) {
    %c0_i32 = arith.constant 0 : i32
    %c0_i32_0 = arith.constant 0 : i32
    %c0_i32_1 = arith.constant 0 : i32
    return %c0_i32, %c0_i32_0 : i32, i32
  }
  func.func @transform_3(%arg0: i32) -> (i32, i32) {
    %c0_i32 = arith.constant 0 : i32
    %c0_i32_0 = arith.constant 0 : i32
    return %c0_i32, %arg0 : i32, i32
  }
}

</mosaic_0001>

<llo_original>
// kernel: zhengqi_forward.2
$region0: #{zhengqi_forward.2}
  #allocation0 [shape = 'u32[]', space=smem, size = 0x4, offset = 0x4, fixed_abs, tag = 'smem constant byte address 0x4 - core index']
  #allocation1 [shape = 'u32[144,128]{1,0:T(1,128)}', space=vmem, size = 0x12000, scoped, tag = 'internal scratch']
  %s0 = inlined_call_operand.vmem [shape: f32[512,38], index: 0, kind: input, shape index: {}]
  %s1 = inlined_call_operand.vmem [shape: f32[2,1,38], index: 1, kind: output, shape index: {0}]
  %s2 = inlined_call_operand.vmem [shape: f32[2,38,38], index: 2, kind: output, shape index: {1}]
  %3 = xla_tuple %s1, %s2
  %s4 = sld [smem:[#allocation0]]
  $region49: #{zhengqi_forward.2} parent=0
    _
  %s6 = ssub.s32 1, %s4
  %s7 = scalar_select 0, %s6, %s4
  loop: start=0, step=1, limit=6
  $region2: #{zhengqi_forward.2} parent=0 // loop_pre_header
    _
  $region3: #{zhengqi_forward.2} parent=0 // loop_header
    %s9 = sphi 0, %s13
    %p10 = scmp.ge.s32.totalorder %s9, 6
    %s16 = sphi 0, %s28
    %s17 = sphi 0, %s24
    %s18 = sphi 0, %s16
    %s19 = sphi 0, %s17
    %s20 = sphi 0, %s18
    %s21 = sphi 0, %s19
    %s35 = sphi 0, %s37
    %s38 = sphi 0, %s35
    %s39 = sphi 0, %s38
    %s55 = sphi 0, %s39
    %s61 = sphi 0, %s63
    %s64 = sphi 0, %s61
    %s65 = sphi 0, %s64
    %s81 = sphi 0, %s65
    %s87 = sphi 0, %s89
    %s90 = sphi 0, %s87
    %s91 = sphi 0, %s90
    %s107 = sphi 0, %s91
  $region4: #{zhengqi_forward.2} parent=0 // loop_header_branch
    %12 = sbr.rel (%p10) target = $region8
  $region5: #{zhengqi_forward.2} parent=0 // loop_body
    %s14 = ssub.s32 %s9, 1
    %s15 = ssub.s32 %s9, 2
    %s22 = sadd.s32 1, %s17
    %p23 = scmp.ge.s32.totalorder %s22, 2
    %s24 = scalar_select %p23, 0, %s22
    %s25 = sadd.s32 1, %s16
    %s26 = scalar_select %p23, %s25, %s16
    %p27 = scmp.ge.s32.totalorder %s26, 2
    %s28 = scalar_select %p27, 0, %s26
    %s29 = smul.u32 %s16, 2
    %s30 = sadd.s32 %s29, %s17
    %s31 = smul.u32 %s28, 2
    %s32 = sadd.s32 %s31, %s24
    %s33 = ssub.s32 %s30, %s32
    %p34 = scmp.eq.s32.totalorder %s33, 0
    %s36 = sadd.s32 %s35, 1
    %s37 = scalar_select %p34, %s35, %s36
    %p40 = pneg %p34
    %p41 = scmp.eq.s32.totalorder %s9, 3
    %p42 = por %p40, %p41
    %p43 = scmp.ne.s32.totalorder %s35, %s38
    %p44 = scmp.eq.s32.totalorder %s9, 0
    %p45 = por %p43, %p44
    %p46 = scmp.ne.s32.totalorder %s35, %s38
    %p47 = scmp.eq.s32.totalorder %s14, 3
    %p48 = por %p46, %p47
    %p49 = scmp.ne.s32.totalorder %s38, %s39
    %p50 = scmp.eq.s32.totalorder %s14, 0
    %p51 = por %p49, %p50
    %p52 = scmp.ne.s32.totalorder %s38, %s39
    %p53 = scmp.eq.s32.totalorder %s15, 3
    %p54 = por %p52, %p53
    %p56 = scmp.ne.s32.totalorder %s39, %s55
    %p57 = scmp.eq.s32.totalorder %s15, 0
    %p58 = por %p56, %p57
    %s59 = ssub.s32 %s16, %s28
    %p60 = scmp.eq.s32.totalorder %s59, 0
    %s62 = sadd.s32 %s61, 1
    %s63 = scalar_select %p60, %s61, %s62
    %p66 = pneg %p60
    %p67 = scmp.eq.s32.totalorder %s9, 3
    %p68 = por %p66, %p67
    %p69 = scmp.ne.s32.totalorder %s61, %s64
    %p70 = scmp.eq.s32.totalorder %s9, 0
    %p71 = por %p69, %p70
    %p72 = scmp.ne.s32.totalorder %s61, %s64
    %p73 = scmp.eq.s32.totalorder %s14, 3
    %p74 = por %p72, %p73
    %p75 = scmp.ne.s32.totalorder %s64, %s65
    %p76 = scmp.eq.s32.totalorder %s14, 0
    %p77 = por %p75, %p76
    %p78 = scmp.ne.s32.totalorder %s64, %s65
    %p79 = scmp.eq.s32.totalorder %s15, 3
    %p80 = por %p78, %p79
    %p82 = scmp.ne.s32.totalorder %s65, %s81
    %p83 = scmp.eq.s32.totalorder %s15, 0
    %p84 = por %p82, %p83
    %s85 = ssub.s32 %s16, %s28
    %p86 = scmp.eq.s32.totalorder %s85, 0
    %s88 = sadd.s32 %s87, 1
    %s89 = scalar_select %p86, %s87, %s88
    %p92 = pneg %p86
    %p93 = scmp.eq.s32.totalorder %s9, 3
    %p94 = por %p92, %p93
    %p95 = scmp.ne.s32.totalorder %s87, %s90
    %p96 = scmp.eq.s32.totalorder %s9, 0
    %p97 = por %p95, %p96
    %p98 = scmp.ne.s32.totalorder %s87, %s90
    %p99 = scmp.eq.s32.totalorder %s14, 3
    %p100 = por %p98, %p99
    %p101 = scmp.ne.s32.totalorder %s90, %s91
    %p102 = scmp.eq.s32.totalorder %s14, 0
    %p103 = por %p101, %p102
    %p104 = scmp.ne.s32.totalorder %s90, %s91
    %p105 = scmp.eq.s32.totalorder %s15, 3
    %p106 = por %p104, %p105
    %p108 = scmp.ne.s32.totalorder %s91, %s107
    %p109 = scmp.eq.s32.totalorder %s15, 0
    %p110 = por %p108, %p109
    %p111 = scmp.le.s32.totalorder 1, %s9
    %p112 = scmp.lt.s32.totalorder %s9, 5
    %p113 = pnand %p111, %p112
    %p114 = pneg %p113
    // Predicated region
    $region9: #{zhengqi_forward.2} parent=5 // pred_check
      _
    $region10: #{zhengqi_forward.2} parent=5 // pred_check_branch
      %116 = sbr.rel (%p113) target = $region12
    $region11: #{zhengqi_forward.2} parent=5 // pred_region
      %s117 = ssub.s32 %s9, 1
    $region12: #{zhengqi_forward.2} parent=5 // pred_fallthru
      _
    %p118 = scmp.lt.s32.totalorder %s9, 4
    // Predicated region
    $region13: #{zhengqi_forward.2} parent=5 // pred_check
      %p119 = pneg %p118
    $region14: #{zhengqi_forward.2} parent=5 // pred_check_branch
      %121 = sbr.rel (%p119) target = $region16
    $region15: #{zhengqi_forward.2} parent=5 // pred_region
      // Predicated region
      $region17: #{zhengqi_forward.2} parent=15 // pred_check
        %p122 = pneg %p45
      $region18: #{zhengqi_forward.2} parent=15 // pred_check_branch
        %124 = sbr.rel (%p122) target = $region20
      $region19: #{zhengqi_forward.2} parent=15 // pred_region
        %s125 = smul.u32 %s16, 2
        %s126 = sadd.s32 %s125, %s17
        %s127 = smul.u32 16, %s126
        %p128 = scmp.lt.s32.totalorder %s127, 63
        %s129 = scalar_select %p128, %s127, 63
        %s130 = smul.addr %s129, 8
        %s131 = scalar_lea.vmem %s0, %s130
        %s132 = smul.u32 %s16, 2
        %s133 = sadd.s32 %s132, %s17
        %s134 = smul.u32 16, %s133
      $region20: #{zhengqi_forward.2} parent=15 // pred_fallthru
        _
    $region16: #{zhengqi_forward.2} parent=5 // pred_fallthru
      _
    %p135 = scmp.le.s32.totalorder 1, %s9
    %p136 = scmp.lt.s32.totalorder %s9, 5
    %p137 = pnand %p135, %p136
    %p138 = pneg %p137
    // Predicated region
    $region21: #{zhengqi_forward.2} parent=5 // pred_check
      _
    $region22: #{zhengqi_forward.2} parent=5 // pred_check_branch
      %140 = sbr.rel (%p137) target = $region24
    $region23: #{zhengqi_forward.2} parent=5 // pred_region
      %s141 = ssub.s32 %s9, 1
      %s142 = smul.u32 %s18, 2
      %s143 = sadd.s32 %s142, %s19
      %s144 = smul.u32 16, %s143
      %p145 = scmp.lt.s32.totalorder %s144, 63
      %s146 = scalar_select %p145, %s144, 63
      %s147 = smul.addr %s146, 8
      %s148 = scalar_lea.vmem %s0, %s147
      %p149 = pneg %p51
      %p150 = pneg %p48
      %p151 = pneg %p77
      %p152 = pneg %p74
      %p153 = scmp.lt.s32.totalorder %s18, 1
      %s154 = scalar_select %p153, %s18, 1
      %s155 = scalar_lea.vmem %s1, %s154
      %p156 = pneg %p103
      %p157 = pneg %p100
      %p158 = scmp.lt.s32.totalorder %s18, 1
      %s159 = scalar_select %p158, %s18, 1
      %s160 = smul.addr %s159, 5
      %s161 = smul.addr %s160, 8
      %s162 = scalar_lea.vmem %s2, %s161
      %s163 = smul.u32 %s18, 2
      %s164 = sadd.s32 %s163, %s19
      %s165 = smul.u32 16, %s164
      %p166 = scmp.lt.s32.totalorder %s165, 63
      %s167 = scalar_select %p166, %s165, 63
      %s168 = smul.addr %s167, 8
      %s169 = scalar_lea.vmem %s0, %s168
      %s170 = smul.u32 %s18, 2
      %s171 = sadd.s32 %s170, %s19
      %s172 = smul.u32 16, %s171
      %p173 = scmp.lt.s32.totalorder %s18, 1
      %s174 = scalar_select %p173, %s18, 1
      %s175 = scalar_lea.vmem %s1, %s174
      %p176 = scmp.lt.s32.totalorder %s18, 1
      %s177 = scalar_select %p176, %s18, 1
      %s178 = smul.addr %s177, 5
      %s179 = smul.addr %s178, 8
      %s180 = scalar_lea.vmem %s2, %s179
      %p181 = scmp.eq.s32.totalorder %s19, 0
      // Predicated region
      $region25: #{zhengqi_forward.2} parent=23 // pred_check
        %p182 = pneg %p181
      $region26: #{zhengqi_forward.2} parent=23 // pred_check_branch
        %184 = sbr.rel (%p182) target = $region28
      $region27: #{zhengqi_forward.2} parent=23 // pred_region
        %vm185 = vcmask 303104
        %186 = vst.msk [vmem:[%s175] sm:$0x1] %vm185, 0.0
        %vm187 = vcmask 310272
        %188 = vst.msk [vmem:[%s180] sm:$0xff] %vm187, 0.0
        %189 = vst.msk [vmem:[%s180 + $0x8] sm:$0xff] %vm187, 0.0
        %190 = vst.msk [vmem:[%s180 + $0x10] sm:$0xff] %vm187, 0.0
        %191 = vst.msk [vmem:[%s180 + $0x18] sm:$0xff] %vm187, 0.0
        %vm192 = vcmask 308224
        %193 = vst.msk [vmem:[%s180 + $0x20] sm:$0x3f] %vm192, 0.0
      $region28: #{zhengqi_forward.2} parent=23 // pred_fallthru
        _
      %v194 = vld [vmem:[%s169] sm:$0xff]
      %v195 = vld [vmem:[%s169 + $0x8] sm:$0xff]
      %v196 = vld [vmem:[%s169 + $0x10] sm:$0xff]
      %v197 = vld [vmem:[%s169 + $0x18] sm:$0xff]
      %v198 = vld [vmem:[%s169 + $0x20] sm:$0xff]
      %v199 = vld [vmem:[%s169 + $0x28] sm:$0xff]
      %v200 = vld [vmem:[%s169 + $0x30] sm:$0xff]
      %v201 = vld [vmem:[%s169 + $0x38] sm:$0xff]
      %v202 = vld [vmem:[%s169 + $0x40] sm:$0xff]
      %v203 = vld [vmem:[%s169 + $0x48] sm:$0xff]
      %v204 = vld [vmem:[%s169 + $0x50] sm:$0xff]
      %v205 = vld [vmem:[%s169 + $0x58] sm:$0xff]
      %v206 = vld [vmem:[%s169 + $0x60] sm:$0xff]
      %v207 = vld [vmem:[%s169 + $0x68] sm:$0xff]
      %v208 = vld [vmem:[%s169 + $0x70] sm:$0xff]
      %v209 = vld [vmem:[%s169 + $0x78] sm:$0xff]
      %v210 = vld [vmem:[%s175] sm:$0x1]
      %211 = vmatprep.subr.mxu0 0.0
      %212 = vmatpush1.msra.mxu0 %v194
      %213 = vmatprep.subr.mxu0 0.0
      %214 = vmatpush1.msra.mxu0 %v195
      %215 = vmatprep.subr.mxu0 0.0
      %216 = vmatpush1.msra.mxu0 %v196
      %217 = vmatprep.subr.mxu0 0.0
      %218 = vmatpush1.msra.mxu0 %v197
      %219 = vmatprep.subr.mxu0 0.0
      %220 = vmatpush1.msra.mxu0 %v198
      %221 = vmatprep.subr.mxu0 0.0
      %222 = vmatpush1.msra.mxu0 %v199
      %223 = vmatprep.subr.mxu0 0.0
      %224 = vmatpush1.msra.mxu0 %v200
      %225 = vmatprep.subr.mxu0 0.0
      %226 = vmatpush1.msra.mxu0 %v201
      %227 = vmatprep.subr.mxu0 0.0
      %228 = vmatpush1.msra.mxu0 %v202
      %229 = vmatprep.subr.mxu0 0.0
      %230 = vmatpush1.msra.mxu0 %v203
      %231 = vmatprep.subr.mxu0 0.0
      %232 = vmatpush1.msra.mxu0 %v204
      %233 = vmatprep.subr.mxu0 0.0
      %234 = vmatpush1.msra.mxu0 %v205
      %235 = vmatprep.subr.mxu0 0.0
      %236 = vmatpush1.msra.mxu0 %v206
      %237 = vmatprep.subr.mxu0 0.0
      %238 = vmatpush1.msra.mxu0 %v207
      %239 = vmatprep.subr.mxu0 0.0
      %240 = vmatpush1.msra.mxu0 %v208
      %241 = vmatprep.subr.mxu0 0.0
      %242 = vmatpush1.msra.mxu0 %v209
      %243 = vmatprep.subr.mxu0 0.0
      %244 = vmatpush1.msra.mxu0 0.0
      %245 = vmatprep.subr.mxu0 0.0
      %246 = vmatpush1.msra.mxu0 0.0
      %247 = vmatprep.subr.mxu0 0.0
      %248 = vmatpush1.msra.mxu0 0.0
      %249 = vmatprep.subr.mxu0 0.0
      %250 = vmatpush1.msra.mxu0 0.0
      %251 = vmatprep.subr.mxu0 0.0
      %252 = vmatpush1.msra.mxu0 0.0
      %253 = vmatprep.subr.mxu0 0.0
      %254 = vmatpush1.msra.mxu0 0.0
      %255 = vmatprep.subr.mxu0 0.0
      %256 = vmatpush1.msra.mxu0 0.0
      %257 = vmatprep.subr.mxu0 0.0
      %258 = vmatpush1.msra.mxu0 0.0
      %259 = vmatprep.subr.mxu0 0.0
      %260 = vmatpush1.msra.mxu0 0.0
      %261 = vmatprep.subr.mxu0 0.0
      %262 = vmatpush1.msra.mxu0 0.0
      %263 = vmatprep.subr.mxu0 0.0
      %264 = vmatpush1.msra.mxu0 0.0
      %265 = vmatprep.subr.mxu0 0.0
      %266 = vmatpush1.msra.mxu0 0.0
      %267 = vmatprep.subr.mxu0 0.0
      %268 = vmatpush1.msra.mxu0 0.0
      %269 = vmatprep.subr.mxu0 0.0
      %270 = vmatpush1.msra.mxu0 0.0
      %271 = vmatprep.subr.mxu0 0.0
      %272 = vmatpush1.msra.mxu0 0.0
      %273 = vmatprep.subr.mxu0 0.0
      %274 = vmatpush1.msra.mxu0 0.0
      %275 = vmatprep.mubr.f32.mxu0 0.0
      %276 = vmatmul.mubr.f32.gmra.mrb[0].mxu0 1.0
      %v277 = vpop.f32.mrb[0].mxu0
      %v278 = vadd.f32 0.0, %v277
      %v279 = vpop.f32.mrb[0].mxu0
      %280 = vdwg.mxu0
      %v281 = vadd.f32 %v210, %v278
      %vm282 = vcmask 303104
      %283 = vst.msk [vmem:[%s175] sm:$0x1] %vm282, %v281
      %v284 = vld [vmem:[%s180] sm:$0xff]
      %v285 = vld [vmem:[%s180 + $0x8] sm:$0xff]
      %v286 = vld [vmem:[%s180 + $0x10] sm:$0xff]
      %v287 = vld [vmem:[%s180 + $0x18] sm:$0xff]
      %v288 = vld [vmem:[%s180 + $0x20] sm:$0x3f]
      %289 = vxpose.xlu0.b32.start [1/16] %v194, 128
      %290 = vxpose.xlu0.b32.cont [2/16] %v195, 128
      %291 = vxpose.xlu0.b32.cont [3/16] %v196, 128
      %292 = vxpose.xlu0.b32.cont [4/16] %v197, 128
      %293 = vxpose.xlu0.b32.cont [5/16] %v198, 128
      %294 = vxpose.xlu0.b32.cont [6/16] %v199, 128
      %295 = vxpose.xlu0.b32.cont [7/16] %v200, 128
      %296 = vxpose.xlu0.b32.cont [8/16] %v201, 128
      %297 = vxpose.xlu0.b32.cont [9/16] %v202, 128
      %298 = vxpose.xlu0.b32.cont [10/16] %v203, 128
      %299 = vxpose.xlu0.b32.cont [11/16] %v204, 128
      %300 = vxpose.xlu0.b32.cont [12/16] %v205, 128
      %301 = vxpose.xlu0.b32.cont [13/16] %v206, 128
      %302 = vxpose.xlu0.b32.cont [14/16] %v207, 128
      %303 = vxpose.xlu0.b32.cont [15/16] %v208, 128
      %304 = vxpose.xlu0.b32.end [16/16] %v209, 128
      %v305 = vpop.trf.xlu0
      %v306 = vpop.trf.xlu0
      %v307 = vpop.trf.xlu0
      %v308 = vpop.trf.xlu0
      %v309 = vpop.trf.xlu0
      %v310 = vpop.trf.xlu0
      %v311 = vpop.trf.xlu0
      %v312 = vpop.trf.xlu0
      %v313 = vpop.trf.xlu0
      %v314 = vpop.trf.xlu0
      %v315 = vpop.trf.xlu0
      %v316 = vpop.trf.xlu0
      %v317 = vpop.trf.xlu0
      %v318 = vpop.trf.xlu0
      %v319 = vpop.trf.xlu0
      %v320 = vpop.trf.xlu0
      %321 = vmatprep.subr.mxu0 0.0
      %322 = vmatpush1.msra.mxu0 %v194
      %323 = vmatprep.subr.mxu0 0.0
      %324 = vmatpush1.msra.mxu0 %v195
      %325 = vmatprep.subr.mxu0 0.0
      %326 = vmatpush1.msra.mxu0 %v196
      %327 = vmatprep.subr.mxu0 0.0
      %328 = vmatpush1.msra.mxu0 %v197
      %329 = vmatprep.subr.mxu0 0.0
      %330 = vmatpush1.msra.mxu0 %v198
      %331 = vmatprep.subr.mxu0 0.0
      %332 = vmatpush1.msra.mxu0 %v199
      %333 = vmatprep.subr.mxu0 0.0
      %334 = vmatpush1.msra.mxu0 %v200
      %335 = vmatprep.subr.mxu0 0.0
      %336 = vmatpush1.msra.mxu0 %v201
      %337 = vmatprep.subr.mxu0 0.0
      %338 = vmatpush1.msra.mxu0 %v202
      %339 = vmatprep.subr.mxu0 0.0
      %340 = vmatpush1.msra.mxu0 %v203
      %341 = vmatprep.subr.mxu0 0.0
      %342 = vmatpush1.msra.mxu0 %v204
      %343 = vmatprep.subr.mxu0 0.0
      %344 = vmatpush1.msra.mxu0 %v205
      %345 = vmatprep.subr.mxu0 0.0
      %346 = vmatpush1.msra.mxu0 %v206
      %347 = vmatprep.subr.mxu0 0.0
      %348 = vmatpush1.msra.mxu0 %v207
      %349 = vmatprep.subr.mxu0 0.0
      %350 = vmatpush1.msra.mxu0 %v208
      %351 = vmatprep.subr.mxu0 0.0
      %352 = vmatpush1.msra.mxu0 %v209
      %353 = vmatprep.subr.mxu0 0.0
      %354 = vmatpush1.msra.mxu0 0.0
      %355 = vmatprep.subr.mxu0 0.0
      %356 = vmatpush1.msra.mxu0 0.0
      %357 = vmatprep.subr.mxu0 0.0
      %358 = vmatpush1.msra.mxu0 0.0
      %359 = vmatprep.subr.mxu0 0.0
      %360 = vmatpush1.msra.mxu0 0.0
      %361 = vmatprep.subr.mxu0 0.0
      %362 = vmatpush1.msra.mxu0 0.0
      %363 = vmatprep.subr.mxu0 0.0
      %364 = vmatpush1.msra.mxu0 0.0
      %365 = vmatprep.subr.mxu0 0.0
      %366 = vmatpush1.msra.mxu0 0.0
      %367 = vmatprep.subr.mxu0 0.0
      %368 = vmatpush1.msra.mxu0 0.0
      %369 = vmatprep.subr.mxu0 0.0
      %370 = vmatpush1.msra.mxu0 0.0
      %371 = vmatprep.subr.mxu0 0.0
      %372 = vmatpush1.msra.mxu0 0.0
      %373 = vmatprep.subr.mxu0 0.0
      %374 = vmatpush1.msra.mxu0 0.0
      %375 = vmatprep.subr.mxu0 0.0
      %376 = vmatpush1.msra.mxu0 0.0
      %377 = vmatprep.subr.mxu0 0.0
      %378 = vmatpush1.msra.mxu0 0.0
      %379 = vmatprep.subr.mxu0 0.0
      %380 = vmatpush1.msra.mxu0 0.0
      %381 = vmatprep.subr.mxu0 0.0
      %382 = vmatpush1.msra.mxu0 0.0
      %383 = vmatprep.subr.mxu0 0.0
      %384 = vmatpush1.msra.mxu0 0.0
      %385 = vmatprep.mubr.f32.mxu0 0.0
      %386 = vmatmul.mubr.f32.gmra.mrb[0].mxu0 %v305
      %v387 = vpop.f32.mrb[0].mxu0
      %v388 = vadd.f32 0.0, %v387
      %v389 = vpop.f32.mrb[0].mxu0
      %390 = vmatprep.mubr.f32.mxu0 0.0
      %391 = vmatmul.mubr.f32.gmra.mrb[0].mxu0 %v306
      %v392 = vpop.f32.mrb[0].mxu0
      %v393 = vadd.f32 0.0, %v392
      %v394 = vpop.f32.mrb[0].mxu0
      %395 = vmatprep.mubr.f32.mxu0 0.0
      %396 = vmatmul.mubr.f32.gmra.mrb[0].mxu0 %v307
      %v397 = vpop.f32.mrb[0].mxu0
      %v398 = vadd.f32 0.0, %v397
      %v399 = vpop.f32.mrb[0].mxu0
      %400 = vmatprep.mubr.f32.mxu0 0.0
      %401 = vmatmul.mubr.f32.gmra.mrb[0].mxu0 %v308
      %v402 = vpop.f32.mrb[0].mxu0
      %v403 = vadd.f32 0.0, %v402
      %v404 = vpop.f32.mrb[0].mxu0
      %405 = vmatprep.mubr.f32.mxu0 0.0
      %406 = vmatmul.mubr.f32.gmra.mrb[0].mxu0 %v309
      %v407 = vpop.f32.mrb[0].mxu0
      %v408 = vadd.f32 0.0, %v407
      %v409 = vpop.f32.mrb[0].mxu0
      %410 = vdwg.mxu0
      %v411 = vadd.f32 %v284, %v388
      %v412 = vadd.f32 %v285, %v393
      %v413 = vadd.f32 %v286, %v398
      %v414 = vadd.f32 %v287, %v403
      %v415 = vadd.f32 %v288, %v408
      %vm416 = vcmask 310272
      %417 = vst.msk [vmem:[%s180] sm:$0xff] %vm416, %v411
      %418 = vst.msk [vmem:[%s180 + $0x8] sm:$0xff] %vm416, %v412
      %419 = vst.msk [vmem:[%s180 + $0x10] sm:$0xff] %vm416, %v413
      %420 = vst.msk [vmem:[%s180 + $0x18] sm:$0xff] %vm416, %v414
      %vm421 = vcmask 308224
      %422 = vst.msk [vmem:[%s180 + $0x20] sm:$0x3f] %vm421, %v415
      %p423 = scmp.lt.s32.totalorder %s18, 1
      %s424 = scalar_select %p423, %s18, 1
      %s425 = scalar_lea.vmem %s1, %s424
      %p426 = scmp.lt.s32.totalorder %s18, 1
      %s427 = scalar_select %p426, %s18, 1
      %s428 = smul.addr %s427, 5
      %s429 = smul.addr %s428, 8
      %s430 = scalar_lea.vmem %s2, %s429
      // Predicated region
      $region29: #{zhengqi_forward.2} parent=23 // pred_check
        %p431 = pneg %p74
      $region30: #{zhengqi_forward.2} parent=23 // pred_check_branch
        %433 = sbr.rel (%p431) target = $region32
      $region31: #{zhengqi_forward.2} parent=23 // pred_region
        _
      $region32: #{zhengqi_forward.2} parent=23 // pred_fallthru
        _
      // Predicated region
      $region33: #{zhengqi_forward.2} parent=23 // pred_check
        %p434 = pneg %p100
      $region34: #{zhengqi_forward.2} parent=23 // pred_check_branch
        %436 = sbr.rel (%p434) target = $region36
      $region35: #{zhengqi_forward.2} parent=23 // pred_region
        _
      $region36: #{zhengqi_forward.2} parent=23 // pred_fallthru
        _
    $region24: #{zhengqi_forward.2} parent=5 // pred_fallthru
      _
    %p437 = scmp.le.s32.totalorder 2, %s9
    // Predicated region
    $region37: #{zhengqi_forward.2} parent=5 // pred_check
      %p438 = pneg %p437
    $region38: #{zhengqi_forward.2} parent=5 // pred_check_branch
      %440 = sbr.rel (%p438) target = $region40
    $region39: #{zhengqi_forward.2} parent=5 // pred_region
      %s441 = ssub.s32 %s9, 2
      // Predicated region
      $region41: #{zhengqi_forward.2} parent=39 // pred_check
        %p442 = pneg %p80
      $region42: #{zhengqi_forward.2} parent=39 // pred_check_branch
        %444 = sbr.rel (%p442) target = $region44
      $region43: #{zhengqi_forward.2} parent=39 // pred_region
        %p445 = scmp.lt.s32.totalorder %s20, 1
        %s446 = scalar_select %p445, %s20, 1
        %s447 = scalar_lea.vmem %s1, %s446
      $region44: #{zhengqi_forward.2} parent=39 // pred_fallthru
        _
      // Predicated region
      $region45: #{zhengqi_forward.2} parent=39 // pred_check
        %p448 = pneg %p106
      $region46: #{zhengqi_forward.2} parent=39 // pred_check_branch
        %450 = sbr.rel (%p448) target = $region48
      $region47: #{zhengqi_forward.2} parent=39 // pred_region
        %p451 = scmp.lt.s32.totalorder %s20, 1
        %s452 = scalar_select %p451, %s20, 1
        %s453 = smul.addr %s452, 5
        %s454 = smul.addr %s453, 8
        %s455 = scalar_lea.vmem %s2, %s454
      $region48: #{zhengqi_forward.2} parent=39 // pred_fallthru
        _
    $region40: #{zhengqi_forward.2} parent=5 // pred_fallthru
      _
  $region6: #{zhengqi_forward.2} parent=0 // loop_footer
    %s13 = sadd.s32 1, %s9
  $region7: #{zhengqi_forward.2} parent=0 // loop_footer_branch
    %8 = sbr.rel target = $region3
  $region8: #{zhengqi_forward.2} parent=0 // loop_exit
    _

// kernel: zhengqi_forward.3
$region0: #{zhengqi_forward.3}
  #allocation0 [shape = 'u32[]', space=smem, size = 0x4, offset = 0x4, fixed_abs, tag = 'smem constant byte address 0x4 - core index']
  #allocation1 [shape = 'u32[144,128]{1,0:T(1,128)}', space=vmem, size = 0x12000, scoped, tag = 'internal scratch']
  %s0 = inlined_call_operand.vmem [shape: f32[512,38], index: 0, kind: input, shape index: {}]
  %s1 = inlined_call_operand.vmem [shape: f32[38,20], index: 1, kind: input, shape index: {}]
  %s2 = inlined_call_operand.vmem [shape: f32[3,20], index: 2, kind: input, shape index: {}]
  %s3 = inlined_call_operand.vmem [shape: f32[1,512], index: 3, kind: output, shape index: {}]
  %s4 = sld [smem:[#allocation0]]
  $region45: #{zhengqi_forward.3} parent=0
    _
  %s6 = ssub.s32 1, %s4
  %s7 = scalar_select 0, %s6, %s4
  loop: start=0, step=1, limit=6
  $region2: #{zhengqi_forward.3} parent=0 // loop_pre_header
    _
  $region3: #{zhengqi_forward.3} parent=0 // loop_header
    %s9 = sphi 0, %s13
    %p10 = scmp.ge.s32.totalorder %s9, 6
    %s19 = sphi 0, %s21
    %s22 = sphi 0, %s19
    %s23 = sphi 0, %s22
    %s39 = sphi 0, %s23
    %s43 = sphi 0, %s43
    %s45 = sphi 0, %s43
    %s46 = sphi 0, %s45
    %s60 = sphi 0, %s46
    %s64 = sphi 0, %s64
    %s66 = sphi 0, %s64
    %s67 = sphi 0, %s66
    %s81 = sphi 0, %s67
    %s87 = sphi 0, %s89
    %s90 = sphi 0, %s87
    %s91 = sphi 0, %s90
    %s107 = sphi 0, %s91
  $region4: #{zhengqi_forward.3} parent=0 // loop_header_branch
    %12 = sbr.rel (%p10) target = $region8
  $region5: #{zhengqi_forward.3} parent=0 // loop_body
    %s14 = ssub.s32 %s9, 1
    %s15 = ssub.s32 %s9, 2
    %s16 = sadd.s32 %s9, 1
    %s17 = ssub.s32 %s9, %s16
    %p18 = scmp.eq.s32.totalorder %s17, 0
    %s20 = sadd.s32 %s19, 1
    %s21 = scalar_select %p18, %s19, %s20
    %p24 = pneg %p18
    %p25 = scmp.eq.s32.totalorder %s9, 3
    %p26 = por %p24, %p25
    %p27 = scmp.ne.s32.totalorder %s19, %s22
    %p28 = scmp.eq.s32.totalorder %s9, 0
    %p29 = por %p27, %p28
    %p30 = scmp.ne.s32.totalorder %s19, %s22
    %p31 = scmp.eq.s32.totalorder %s14, 3
    %p32 = por %p30, %p31
    %p33 = scmp.ne.s32.totalorder %s22, %s23
    %p34 = scmp.eq.s32.totalorder %s14, 0
    %p35 = por %p33, %p34
    %p36 = scmp.ne.s32.totalorder %s22, %s23
    %p37 = scmp.eq.s32.totalorder %s15, 3
    %p38 = por %p36, %p37
    %p40 = scmp.ne.s32.totalorder %s23, %s39
    %p41 = scmp.eq.s32.totalorder %s15, 0
    %p42 = por %p40, %p41
    %s44 = sadd.s32 %s43, 1
    %p47 = scmp.eq.s32.totalorder %s9, 3
    %p48 = scmp.ne.s32.totalorder %s43, %s45
    %p49 = scmp.eq.s32.totalorder %s9, 0
    %p50 = por %p48, %p49
    %p51 = scmp.ne.s32.totalorder %s43, %s45
    %p52 = scmp.eq.s32.totalorder %s14, 3
    %p53 = por %p51, %p52
    %p54 = scmp.ne.s32.totalorder %s45, %s46
    %p55 = scmp.eq.s32.totalorder %s14, 0
    %p56 = por %p54, %p55
    %p57 = scmp.ne.s32.totalorder %s45, %s46
    %p58 = scmp.eq.s32.totalorder %s15, 3
    %p59 = por %p57, %p58
    %p61 = scmp.ne.s32.totalorder %s46, %s60
    %p62 = scmp.eq.s32.totalorder %s15, 0
    %p63 = por %p61, %p62
    %s65 = sadd.s32 %s64, 1
    %p68 = scmp.eq.s32.totalorder %s9, 3
    %p69 = scmp.ne.s32.totalorder %s64, %s66
    %p70 = scmp.eq.s32.totalorder %s9, 0
    %p71 = por %p69, %p70
    %p72 = scmp.ne.s32.totalorder %s64, %s66
    %p73 = scmp.eq.s32.totalorder %s14, 3
    %p74 = por %p72, %p73
    %p75 = scmp.ne.s32.totalorder %s66, %s67
    %p76 = scmp.eq.s32.totalorder %s14, 0
    %p77 = por %p75, %p76
    %p78 = scmp.ne.s32.totalorder %s66, %s67
    %p79 = scmp.eq.s32.totalorder %s15, 3
    %p80 = por %p78, %p79
    %p82 = scmp.ne.s32.totalorder %s67, %s81
    %p83 = scmp.eq.s32.totalorder %s15, 0
    %p84 = por %p82, %p83
    %s85 = ssub.s32 %s9, %s16
    %p86 = scmp.eq.s32.totalorder %s85, 0
    %s88 = sadd.s32 %s87, 1
    %s89 = scalar_select %p86, %s87, %s88
    %p92 = pneg %p86
    %p93 = scmp.eq.s32.totalorder %s9, 3
    %p94 = por %p92, %p93
    %p95 = scmp.ne.s32.totalorder %s87, %s90
    %p96 = scmp.eq.s32.totalorder %s9, 0
    %p97 = por %p95, %p96
    %p98 = scmp.ne.s32.totalorder %s87, %s90
    %p99 = scmp.eq.s32.totalorder %s14, 3
    %p100 = por %p98, %p99
    %p101 = scmp.ne.s32.totalorder %s90, %s91
    %p102 = scmp.eq.s32.totalorder %s14, 0
    %p103 = por %p101, %p102
    %p104 = scmp.ne.s32.totalorder %s90, %s91
    %p105 = scmp.eq.s32.totalorder %s15, 3
    %p106 = por %p104, %p105
    %p108 = scmp.ne.s32.totalorder %s91, %s107
    %p109 = scmp.eq.s32.totalorder %s15, 0
    %p110 = por %p108, %p109
    %p111 = scmp.le.s32.totalorder 1, %s9
    %p112 = scmp.lt.s32.totalorder %s9, 5
    %p113 = pnand %p111, %p112
    %p114 = pneg %p113
    // Predicated region
    $region9: #{zhengqi_forward.3} parent=5 // pred_check
      _
    $region10: #{zhengqi_forward.3} parent=5 // pred_check_branch
      %116 = sbr.rel (%p113) target = $region12
    $region11: #{zhengqi_forward.3} parent=5 // pred_region
      %s117 = ssub.s32 %s9, 1
      // Predicated region
      $region13: #{zhengqi_forward.3} parent=11 // pred_check
        %p118 = pneg %p56
      $region14: #{zhengqi_forward.3} parent=11 // pred_check_branch
        %120 = sbr.rel (%p118) target = $region16
      $region15: #{zhengqi_forward.3} parent=11 // pred_region
        _
      $region16: #{zhengqi_forward.3} parent=11 // pred_fallthru
        _
      // Predicated region
      $region17: #{zhengqi_forward.3} parent=11 // pred_check
        %p121 = pneg %p77
      $region18: #{zhengqi_forward.3} parent=11 // pred_check_branch
        %123 = sbr.rel (%p121) target = $region20
      $region19: #{zhengqi_forward.3} parent=11 // pred_region
        _
      $region20: #{zhengqi_forward.3} parent=11 // pred_fallthru
        _
    $region12: #{zhengqi_forward.3} parent=5 // pred_fallthru
      _
    %p124 = scmp.lt.s32.totalorder %s9, 4
    // Predicated region
    $region21: #{zhengqi_forward.3} parent=5 // pred_check
      %p125 = pneg %p124
    $region22: #{zhengqi_forward.3} parent=5 // pred_check_branch
      %127 = sbr.rel (%p125) target = $region24
    $region23: #{zhengqi_forward.3} parent=5 // pred_region
      // Predicated region
      $region25: #{zhengqi_forward.3} parent=23 // pred_check
        %p128 = pneg %p29
      $region26: #{zhengqi_forward.3} parent=23 // pred_check_branch
        %130 = sbr.rel (%p128) target = $region28
      $region27: #{zhengqi_forward.3} parent=23 // pred_region
        %s131 = smul.u32 16, %s9
        %p132 = scmp.lt.s32.totalorder %s131, 63
        %s133 = scalar_select %p132, %s131, 63
        %s134 = smul.addr %s133, 8
        %s135 = scalar_lea.vmem %s0, %s134
        %s136 = smul.u32 16, %s9
      $region28: #{zhengqi_forward.3} parent=23 // pred_fallthru
        _
    $region24: #{zhengqi_forward.3} parent=5 // pred_fallthru
      _
    %p137 = scmp.le.s32.totalorder 1, %s9
    %p138 = scmp.lt.s32.totalorder %s9, 5
    %p139 = pnand %p137, %p138
    %p140 = pneg %p139
    // Predicated region
    $region29: #{zhengqi_forward.3} parent=5 // pred_check
      _
    $region30: #{zhengqi_forward.3} parent=5 // pred_check_branch
      %142 = sbr.rel (%p139) target = $region32
    $region31: #{zhengqi_forward.3} parent=5 // pred_region
      %s143 = ssub.s32 %s9, 1
      %s144 = smul.u32 16, %s14
      %p145 = scmp.lt.s32.totalorder %s144, 63
      %s146 = scalar_select %p145, %s144, 63
      %s147 = smul.addr %s146, 8
      %s148 = scalar_lea.vmem %s0, %s147
      %p149 = pneg %p35
      %p150 = pneg %p32
      %p151 = pneg %p56
      %p152 = pneg %p53
      %p153 = pneg %p77
      %p154 = pneg %p74
      %p155 = pneg %p103
      %p156 = pneg %p100
      %p157 = scmp.lt.s32.totalorder %s14, 3
      %s158 = scalar_select %p157, %s14, 3
      %s159 = scalar_lea.vmem %s3, %s158
      %s160 = smul.u32 16, %s14
      %p161 = scmp.lt.s32.totalorder %s160, 63
      %s162 = scalar_select %p161, %s160, 63
      %s163 = smul.addr %s162, 8
      %s164 = scalar_lea.vmem %s0, %s163
      %s165 = smul.u32 16, %s14
      %p166 = scmp.lt.s32.totalorder %s14, 3
      %s167 = scalar_select %p166, %s14, 3
      %s168 = scalar_lea.vmem %s3, %s167
      %v169 = vld [vmem:[%s164] sm:$0xff]
      %v170 = vld [vmem:[%s164 + $0x8] sm:$0xff]
      %v171 = vld [vmem:[%s164 + $0x10] sm:$0xff]
      %v172 = vld [vmem:[%s164 + $0x18] sm:$0xff]
      %v173 = vld [vmem:[%s164 + $0x20] sm:$0xff]
      %v174 = vld [vmem:[%s164 + $0x28] sm:$0xff]
      %v175 = vld [vmem:[%s164 + $0x30] sm:$0xff]
      %v176 = vld [vmem:[%s164 + $0x38] sm:$0xff]
      %v177 = vld [vmem:[%s164 + $0x40] sm:$0xff]
      %v178 = vld [vmem:[%s164 + $0x48] sm:$0xff]
      %v179 = vld [vmem:[%s164 + $0x50] sm:$0xff]
      %v180 = vld [vmem:[%s164 + $0x58] sm:$0xff]
      %v181 = vld [vmem:[%s164 + $0x60] sm:$0xff]
      %v182 = vld [vmem:[%s164 + $0x68] sm:$0xff]
      %v183 = vld [vmem:[%s164 + $0x70] sm:$0xff]
      %v184 = vld [vmem:[%s164 + $0x78] sm:$0xff]
      %v185 = vld [vmem:[%s1] sm:$0xff]
      %v186 = vld [vmem:[%s1 + $0x8] sm:$0xff]
      %v187 = vld [vmem:[%s1 + $0x10] sm:$0xff]
      %v188 = vld [vmem:[%s1 + $0x18] sm:$0xff]
      %v189 = vld [vmem:[%s1 + $0x20] sm:$0x3f]
      %v190 = vld [vmem:[%s2] sm:$0x1]
      %v191 = vlaneseq
      %v192 = vshrl.u32 %v191, 7
      %v193 = vsub.s32 0, %v192
      %v194 = vrot.slane %v190, %v193
      %vm195 = vcmask 310272
      %v197 = vsel %vm195, %v169, 0
      %v200 = vsel %vm195, %v170, 0
      %v203 = vsel %vm195, %v171, 0
      %v206 = vsel %vm195, %v172, 0
      %v209 = vsel %vm195, %v173, 0
      %v212 = vsel %vm195, %v174, 0
      %v215 = vsel %vm195, %v175, 0
      %v218 = vsel %vm195, %v176, 0
      %v221 = vsel %vm195, %v177, 0
      %v224 = vsel %vm195, %v178, 0
      %v227 = vsel %vm195, %v179, 0
      %v230 = vsel %vm195, %v180, 0
      %v233 = vsel %vm195, %v181, 0
      %v236 = vsel %vm195, %v182, 0
      %v239 = vsel %vm195, %v183, 0
      %v242 = vsel %vm195, %v184, 0
      %vm244 = vcmask 1045504
      %v246 = vsel %vm244, %v189, 0
      %248 = vmatprep.subr.mxu0 0.0
      %249 = vmatpush1.msra.mxu0 %v185
      %250 = vmatprep.subr.mxu0 0.0
      %251 = vmatpush1.msra.mxu0 %v186
      %252 = vmatprep.subr.mxu0 0.0
      %253 = vmatpush1.msra.mxu0 %v187
      %254 = vmatprep.subr.mxu0 0.0
      %255 = vmatpush1.msra.mxu0 %v188
      %256 = vmatprep.subr.mxu0 0.0
      %257 = vmatpush1.msra.mxu0 %v246
      %258 = vmatprep.subr.mxu0 0.0
      %259 = vmatpush1.msra.mxu0 0.0
      %260 = vmatprep.subr.mxu0 0.0
      %261 = vmatpush1.msra.mxu0 0.0
      %262 = vmatprep.subr.mxu0 0.0
      %263 = vmatpush1.msra.mxu0 0.0
      %264 = vmatprep.subr.mxu0 0.0
      %265 = vmatpush1.msra.mxu0 0.0
      %266 = vmatprep.subr.mxu0 0.0
      %267 = vmatpush1.msra.mxu0 0.0
      %268 = vmatprep.subr.mxu0 0.0
      %269 = vmatpush1.msra.mxu0 0.0
      %270 = vmatprep.subr.mxu0 0.0
      %271 = vmatpush1.msra.mxu0 0.0
      %272 = vmatprep.subr.mxu0 0.0
      %273 = vmatpush1.msra.mxu0 0.0
      %274 = vmatprep.subr.mxu0 0.0
      %275 = vmatpush1.msra.mxu0 0.0
      %276 = vmatprep.subr.mxu0 0.0
      %277 = vmatpush1.msra.mxu0 0.0
      %278 = vmatprep.subr.mxu0 0.0
      %279 = vmatpush1.msra.mxu0 0.0
      %280 = vmatprep.subr.mxu0 0.0
      %281 = vmatpush1.msra.mxu0 0.0
      %282 = vmatprep.subr.mxu0 0.0
      %283 = vmatpush1.msra.mxu0 0.0
      %284 = vmatprep.subr.mxu0 0.0
      %285 = vmatpush1.msra.mxu0 0.0
      %286 = vmatprep.subr.mxu0 0.0
      %287 = vmatpush1.msra.mxu0 0.0
      %288 = vmatprep.subr.mxu0 0.0
      %289 = vmatpush1.msra.mxu0 0.0
      %290 = vmatprep.subr.mxu0 0.0
      %291 = vmatpush1.msra.mxu0 0.0
      %292 = vmatprep.subr.mxu0 0.0
      %293 = vmatpush1.msra.mxu0 0.0
      %294 = vmatprep.subr.mxu0 0.0
      %295 = vmatpush1.msra.mxu0 0.0
      %296 = vmatprep.subr.mxu0 0.0
      %297 = vmatpush1.msra.mxu0 0.0
      %298 = vmatprep.subr.mxu0 0.0
      %299 = vmatpush1.msra.mxu0 0.0
      %300 = vmatprep.subr.mxu0 0.0
      %301 = vmatpush1.msra.mxu0 0.0
      %302 = vmatprep.subr.mxu0 0.0
      %303 = vmatpush1.msra.mxu0 0.0
      %304 = vmatprep.subr.mxu0 0.0
      %305 = vmatpush1.msra.mxu0 0.0
      %306 = vmatprep.subr.mxu0 0.0
      %307 = vmatpush1.msra.mxu0 0.0
      %308 = vmatprep.subr.mxu0 0.0
      %309 = vmatpush1.msra.mxu0 0.0
      %310 = vmatprep.subr.mxu0 0.0
      %311 = vmatpush1.msra.mxu0 0.0
      %312 = vmatprep.mubr.f32.mxu0 0.0
      %313 = vmatmul.mubr.f32.gmra.mrb[0].mxu0 %v197
      %v314 = vpop.f32.mrb[0].mxu0
      %v315 = vadd.f32 %v194, %v314
      %v316 = vpop.f32.mrb[0].mxu0
      %317 = vmatprep.mubr.f32.mxu0 0.0
      %318 = vmatmul.mubr.f32.gmra.mrb[0].mxu0 %v200
      %v319 = vpop.f32.mrb[0].mxu0
      %v320 = vadd.f32 %v194, %v319
      %v321 = vpop.f32.mrb[0].mxu0
      %322 = vmatprep.mubr.f32.mxu0 0.0
      %323 = vmatmul.mubr.f32.gmra.mrb[0].mxu0 %v203
      %v324 = vpop.f32.mrb[0].mxu0
      %v325 = vadd.f32 %v194, %v324
      %v326 = vpop.f32.mrb[0].mxu0
      %327 = vmatprep.mubr.f32.mxu0 0.0
      %328 = vmatmul.mubr.f32.gmra.mrb[0].mxu0 %v206
      %v329 = vpop.f32.mrb[0].mxu0
      %v330 = vadd.f32 %v194, %v329
      %v331 = vpop.f32.mrb[0].mxu0
      %332 = vmatprep.mubr.f32.mxu0 0.0
      %333 = vmatmul.mubr.f32.gmra.mrb[0].mxu0 %v209
      %v334 = vpop.f32.mrb[0].mxu0
      %v335 = vadd.f32 %v194, %v334
      %v336 = vpop.f32.mrb[0].mxu0
      %337 = vmatprep.mubr.f32.mxu0 0.0
      %338 = vmatmul.mubr.f32.gmra.mrb[0].mxu0 %v212
      %v339 = vpop.f32.mrb[0].mxu0
      %v340 = vadd.f32 %v194, %v339
      %v341 = vpop.f32.mrb[0].mxu0
      %342 = vmatprep.mubr.f32.mxu0 0.0
      %343 = vmatmul.mubr.f32.gmra.mrb[0].mxu0 %v215
      %v344 = vpop.f32.mrb[0].mxu0
      %v345 = vadd.f32 %v194, %v344
      %v346 = vpop.f32.mrb[0].mxu0
      %347 = vmatprep.mubr.f32.mxu0 0.0
      %348 = vmatmul.mubr.f32.gmra.mrb[0].mxu0 %v218
      %v349 = vpop.f32.mrb[0].mxu0
      %v350 = vadd.f32 %v194, %v349
      %v351 = vpop.f32.mrb[0].mxu0
      %352 = vmatprep.mubr.f32.mxu0 0.0
      %353 = vmatmul.mubr.f32.gmra.mrb[0].mxu0 %v221
      %v354 = vpop.f32.mrb[0].mxu0
      %v355 = vadd.f32 %v194, %v354
      %v356 = vpop.f32.mrb[0].mxu0
      %357 = vmatprep.mubr.f32.mxu0 0.0
      %358 = vmatmul.mubr.f32.gmra.mrb[0].mxu0 %v224
      %v359 = vpop.f32.mrb[0].mxu0
      %v360 = vadd.f32 %v194, %v359
      %v361 = vpop.f32.mrb[0].mxu0
      %362 = vmatprep.mubr.f32.mxu0 0.0
      %363 = vmatmul.mubr.f32.gmra.mrb[0].mxu0 %v227
      %v364 = vpop.f32.mrb[0].mxu0
      %v365 = vadd.f32 %v194, %v364
      %v366 = vpop.f32.mrb[0].mxu0
      %367 = vmatprep.mubr.f32.mxu0 0.0
      %368 = vmatmul.mubr.f32.gmra.mrb[0].mxu0 %v230
      %v369 = vpop.f32.mrb[0].mxu0
      %v370 = vadd.f32 %v194, %v369
      %v371 = vpop.f32.mrb[0].mxu0
      %372 = vmatprep.mubr.f32.mxu0 0.0
      %373 = vmatmul.mubr.f32.gmra.mrb[0].mxu0 %v233
      %v374 = vpop.f32.mrb[0].mxu0
      %v375 = vadd.f32 %v194, %v374
      %v376 = vpop.f32.mrb[0].mxu0
      %377 = vmatprep.mubr.f32.mxu0 0.0
      %378 = vmatmul.mubr.f32.gmra.mrb[0].mxu0 %v236
      %v379 = vpop.f32.mrb[0].mxu0
      %v380 = vadd.f32 %v194, %v379
      %v381 = vpop.f32.mrb[0].mxu0
      %382 = vmatprep.mubr.f32.mxu0 0.0
      %383 = vmatmul.mubr.f32.gmra.mrb[0].mxu0 %v239
      %v384 = vpop.f32.mrb[0].mxu0
      %v385 = vadd.f32 %v194, %v384
      %v386 = vpop.f32.mrb[0].mxu0
      %387 = vmatprep.mubr.f32.mxu0 0.0
      %388 = vmatmul.mubr.f32.gmra.mrb[0].mxu0 %v242
      %v389 = vpop.f32.mrb[0].mxu0
      %v390 = vadd.f32 %v194, %v389
      %v391 = vpop.f32.mrb[0].mxu0
      %392 = vdwg.mxu0
      %v393 = vmax.f32 %v315, 0.0
      %v394 = vmax.f32 %v320, 0.0
      %v395 = vmax.f32 %v325, 0.0
      %v396 = vmax.f32 %v330, 0.0
      %v397 = vmax.f32 %v335, 0.0
      %v398 = vmax.f32 %v340, 0.0
      %v399 = vmax.f32 %v345, 0.0
      %v400 = vmax.f32 %v350, 0.0
      %v401 = vmax.f32 %v355, 0.0
      %v402 = vmax.f32 %v360, 0.0
      %v403 = vmax.f32 %v365, 0.0
      %v404 = vmax.f32 %v370, 0.0
      %v405 = vmax.f32 %v375, 0.0
      %v406 = vmax.f32 %v380, 0.0
      %v407 = vmax.f32 %v385, 0.0
      %v408 = vmax.f32 %v390, 0.0
      %v409 = vld [vmem:[%s2 + $0x1] sm:$0x1]
      %v410 = vld [vmem:[%s2 + $0x2] sm:$0x1]
      %412 = vset.pattern.permute.xlu0 0
      %413 = vperm.xlu0 %412, %v410
      %v414 = vpop.permute.xlu0 %413
      %vm416 = vcmask 162816
      %v418 = vsel %vm416, %v409, 0
      %v421 = vsel %vm416, %v393, 0
      %v424 = vsel %vm416, %v394, 0
      %v427 = vsel %vm416, %v395, 0
      %v430 = vsel %vm416, %v396, 0
      %v433 = vsel %vm416, %v397, 0
      %v436 = vsel %vm416, %v398, 0
      %v439 = vsel %vm416, %v399, 0
      %v442 = vsel %vm416, %v400, 0
      %v445 = vsel %vm416, %v401, 0
      %v448 = vsel %vm416, %v402, 0
      %v451 = vsel %vm416, %v403, 0
      %v454 = vsel %vm416, %v404, 0
      %v457 = vsel %vm416, %v405, 0
      %v460 = vsel %vm416, %v406, 0
      %v463 = vsel %vm416, %v407, 0
      %v466 = vsel %vm416, %v408, 0
      %468 = vmatprep.subr.mxu0 0.0
      %469 = vmatpush1.xpose.msra.mxu0 %v421
      %470 = vmatprep.subr.mxu0 0.0
      %471 = vmatpush1.xpose.msra.mxu0 %v424
      %472 = vmatprep.subr.mxu0 0.0
      %473 = vmatpush1.xpose.msra.mxu0 %v427
      %474 = vmatprep.subr.mxu0 0.0
      %475 = vmatpush1.xpose.msra.mxu0 %v430
      %476 = vmatprep.subr.mxu0 0.0
      %477 = vmatpush1.xpose.msra.mxu0 %v433
      %478 = vmatprep.subr.mxu0 0.0
      %479 = vmatpush1.xpose.msra.mxu0 %v436
      %480 = vmatprep.subr.mxu0 0.0
      %481 = vmatpush1.xpose.msra.mxu0 %v439
      %482 = vmatprep.subr.mxu0 0.0
      %483 = vmatpush1.xpose.msra.mxu0 %v442
      %484 = vmatprep.subr.mxu0 0.0
      %485 = vmatpush1.xpose.msra.mxu0 %v445
      %486 = vmatprep.subr.mxu0 0.0
      %487 = vmatpush1.xpose.msra.mxu0 %v448
      %488 = vmatprep.subr.mxu0 0.0
      %489 = vmatpush1.xpose.msra.mxu0 %v451
      %490 = vmatprep.subr.mxu0 0.0
      %491 = vmatpush1.xpose.msra.mxu0 %v454
      %492 = vmatprep.subr.mxu0 0.0
      %493 = vmatpush1.xpose.msra.mxu0 %v457
      %494 = vmatprep.subr.mxu0 0.0
      %495 = vmatpush1.xpose.msra.mxu0 %v460
      %496 = vmatprep.subr.mxu0 0.0
      %497 = vmatpush1.xpose.msra.mxu0 %v463
      %498 = vmatprep.subr.mxu0 0.0
      %499 = vmatpush1.xpose.msra.mxu0 %v466
      %500 = vmatprep.subr.mxu0 0.0
      %501 = vmatpush1.xpose.msra.mxu0 0.0
      %502 = vmatprep.subr.mxu0 0.0
      %503 = vmatpush1.xpose.msra.mxu0 0.0
      %504 = vmatprep.subr.mxu0 0.0
      %505 = vmatpush1.xpose.msra.mxu0 0.0
      %506 = vmatprep.subr.mxu0 0.0
      %507 = vmatpush1.xpose.msra.mxu0 0.0
      %508 = vmatprep.subr.mxu0 0.0
      %509 = vmatpush1.xpose.msra.mxu0 0.0
      %510 = vmatprep.subr.mxu0 0.0
      %511 = vmatpush1.xpose.msra.mxu0 0.0
      %512 = vmatprep.subr.mxu0 0.0
      %513 = vmatpush1.xpose.msra.mxu0 0.0
      %514 = vmatprep.subr.mxu0 0.0
      %515 = vmatpush1.xpose.msra.mxu0 0.0
      %516 = vmatprep.subr.mxu0 0.0
      %517 = vmatpush1.xpose.msra.mxu0 0.0
      %518 = vmatprep.subr.mxu0 0.0
      %519 = vmatpush1.xpose.msra.mxu0 0.0
      %520 = vmatprep.subr.mxu0 0.0
      %521 = vmatpush1.xpose.msra.mxu0 0.0
      %522 = vmatprep.subr.mxu0 0.0
      %523 = vmatpush1.xpose.msra.mxu0 0.0
      %524 = vmatprep.subr.mxu0 0.0
      %525 = vmatpush1.xpose.msra.mxu0 0.0
      %526 = vmatprep.subr.mxu0 0.0
      %527 = vmatpush1.xpose.msra.mxu0 0.0
      %528 = vmatprep.subr.mxu0 0.0
      %529 = vmatpush1.xpose.msra.mxu0 0.0
      %530 = vmatprep.subr.mxu0 0.0
      %531 = vmatpush1.xpose.msra.mxu0 0.0
      %532 = vmatprep.mubr.f32.mxu0 0.0
      %533 = vmatmul.mubr.f32.gmra.mrb[0].mxu0 %v418
      %v534 = vpop.f32.mrb[0].mxu0
      %v535 = vadd.f32 %v414, %v534
      %v536 = vpop.f32.mrb[0].mxu0
      %537 = vdwg.mxu0
      %538 = vst [vmem:[%s168] sm:$0x1] %v535
      %p539 = scmp.lt.s32.totalorder %s14, 3
      %s540 = scalar_select %p539, %s14, 3
      %s541 = scalar_lea.vmem %s3, %s540
      // Predicated region
      $region33: #{zhengqi_forward.3} parent=31 // pred_check
        %p542 = pneg %p100
      $region34: #{zhengqi_forward.3} parent=31 // pred_check_branch
        %544 = sbr.rel (%p542) target = $region36
      $region35: #{zhengqi_forward.3} parent=31 // pred_region
        _
      $region36: #{zhengqi_forward.3} parent=31 // pred_fallthru
        _
    $region32: #{zhengqi_forward.3} parent=5 // pred_fallthru
      _
    %p545 = scmp.le.s32.totalorder 2, %s9
    // Predicated region
    $region37: #{zhengqi_forward.3} parent=5 // pred_check
      %p546 = pneg %p545
    $region38: #{zhengqi_forward.3} parent=5 // pred_check_branch
      %548 = sbr.rel (%p546) target = $region40
    $region39: #{zhengqi_forward.3} parent=5 // pred_region
      %s549 = ssub.s32 %s9, 2
      // Predicated region
      $region41: #{zhengqi_forward.3} parent=39 // pred_check
        %p550 = pneg %p106
      $region42: #{zhengqi_forward.3} parent=39 // pred_check_branch
        %552 = sbr.rel (%p550) target = $region44
      $region43: #{zhengqi_forward.3} parent=39 // pred_region
        %p553 = scmp.lt.s32.totalorder %s15, 3
        %s554 = scalar_select %p553, %s15, 3
        %s555 = scalar_lea.vmem %s3, %s554
      $region44: #{zhengqi_forward.3} parent=39 // pred_fallthru
        _
    $region40: #{zhengqi_forward.3} parent=5 // pred_fallthru
      _
  $region6: #{zhengqi_forward.3} parent=0 // loop_footer
    %s13 = sadd.s32 1, %s9
  $region7: #{zhengqi_forward.3} parent=0 // loop_footer_branch
    %8 = sbr.rel target = $region3
  $region8: #{zhengqi_forward.3} parent=0 // loop_exit
    _

</llo_original>
